<compile_context>
chip_gen: v6e
topology: v6e:2x2x1
jax: 0.10.0
libtpu: 0.0.40
codegen_flags: <defaults>
</compile_context>

<pallas_src>
import functools

import jax
import jax.numpy as jnp
from jax.experimental import pallas as pl
from jax.experimental.pallas import tpu as pltpu


def _vmem_budgets():
    """(vmem_limit_bytes, per-block byte budget), generation-gated."""
    cap = 64 * 1024 * 1024                      # conservative default (v7x per-TC VMEM)
    try:
        info = pltpu.get_tpu_info()
        cap = int(getattr(info, "vmem_capacity_bytes", cap)) or cap
    except Exception:
        pass
    vmem_limit = min(cap // 2, 64 * 1024 * 1024)          # 64 MiB v5e/v6e, 32 MiB v7x
    block_budget = max(1 * 1024 * 1024, vmem_limit // 16)  # 4 MiB / 2 MiB per block
    return vmem_limit, block_budget


def _round_up(x, m):
    return (x + m - 1) // m * m


def _pick_fused_rows(NC, C, HW, itemsize, budget):
    """Row tile TR for the fused kernel.

    Requirements: TR divides NC, TR % C == 0 (groups stay whole), TR % 8 == 0
    or TR == NC (sublane rule), and the (TR, HW) slab fits the block budget.
    Prefers candidates that give >= 2 grid steps so v7x's two TensorCores both
    get work.  Returns None when no legal slab fits -> two-pass fallback.
    """
    row_cap = max(512, C)          # keeps the block-diagonal gate weights tiny
    cands = []
    for d in range(min(NC, row_cap), 0, -1):
        if NC % d or d % C:
            continue
        if d % 8 and d != NC:
            continue
        if d * HW * itemsize > budget:
            continue
        cands.append(d)
    if not cands:
        return None
    multi = [d for d in cands if NC // d >= 2]
    return multi[0] if multi else cands[0]


# ---------------------------------------------------------------------------
# fused single pass: pool + gate + scale (x read from HBM exactly once)
# ---------------------------------------------------------------------------
def _fused_kernel(x_ref, r1_ref, r2_ref, o_ref):
    # x_ref : (TR, HW)  folded (batch*channel, spatial) tile
    # r1_ref: (GH, TR)  block-diagonal kron(I, W1) / (H*W)   (f32, resident)
    # r2_ref: (TR, GH)  block-diagonal kron(I, W2)           (f32, resident)
    # o_ref : (TR, HW)  gated output tile
    x = x_ref[...].astype(jnp.float32)
    rowsum = jnp.sum(x, axis=-1, keepdims=True)                       # (TR, 1)
    hidden = jnp.maximum(
        jnp.dot(r1_ref[...], rowsum, preferred_element_type=jnp.float32), 0.0)
    gate = jax.nn.sigmoid(
        jnp.dot(r2_ref[...], hidden, preferred_element_type=jnp.float32))  # (TR, 1)
    o_ref[...] = (x * gate).astype(o_ref.dtype)


# ---------------------------------------------------------------------------
# two-pass fallback (only when the full-HW row slab cannot fit VMEM)
# ---------------------------------------------------------------------------
def _pool_kernel(x_ref, sum_ref, acc_ref, *, hw_total, masked):
    # pass 1: spatial sums on the folded layout; HW reduction axis is last.
    h = pl.program_id(1)

    @pl.when(h == 0)
    def _init():
        acc_ref[...] = jnp.zeros_like(acc_ref)

    x = x_ref[...].astype(jnp.float32)                             # (TR, THW)
    if masked:  # zero the padded lanes of the boundary HW tile
        col = jax.lax.broadcasted_iota(jnp.int32, x.shape, 1) + h * x.shape[1]
        x = jnp.where(col < hw_total, x, 0.0)
    acc_ref[...] += jnp.sum(x, axis=-1, keepdims=True)

    @pl.when(h == pl.num_programs(1) - 1)
    def _fin():
        sum_ref[...] = acc_ref[...]


def _scale_kernel(x_ref, g_ref, o_ref):
    # pass 2: multiply with the full-precision f32 gate; cast only on store.
    o_ref[...] = (x_ref[...].astype(jnp.float32) * g_ref[...]).astype(o_ref.dtype)


# ---------------------------------------------------------------------------
# wrapper
# ---------------------------------------------------------------------------
def se_conv(x, w1, w2, *, force_two_pass=False):
    """x: (N, C, H, W); w1: (Cr, C, 1, 1); w2: (C, Cr, 1, 1). Returns (N, C, H, W)."""
    N, C, H, W = x.shape
    Cr = w1.shape[0]
    assert w1.shape == (Cr, C, 1, 1) and w2.shape == (C, Cr, 1, 1)
    HW = H * W
    NC = N * C
    itemsize = jnp.dtype(x.dtype).itemsize
    vmem_limit, budget = _vmem_budgets()

    x2 = x.reshape(NC, HW)                      # folded, n-major / c-minor rows
    w1m = w1.reshape(Cr, C).astype(jnp.float32)
    w2m = w2.reshape(C, Cr).astype(jnp.float32)

    TR = None if force_two_pass else _pick_fused_rows(NC, C, HW, itemsize, budget)

    if TR is not None:
        # ---- fused single pass -------------------------------------------
        G = TR // C                      # batch groups per row tile
        GH = G * Cr                      # hidden rows per tile
        # Block-diagonal gate weights; 1/(H*W) of the average pool folded in.
        r1 = (jnp.kron(jnp.eye(G, dtype=jnp.float32), w1m) / HW)     # (GH, TR)
        r2 = jnp.kron(jnp.eye(G, dtype=jnp.float32), w2m)            # (TR, GH)

        out2 = pl.pallas_call(
            _fused_kernel,
            out_shape=jax.ShapeDtypeStruct((NC, HW), x.dtype),
            grid_spec=pltpu.PrefetchScalarGridSpec(
                num_scalar_prefetch=0,
                grid=(NC // TR,),
                in_specs=[
                    pl.BlockSpec((TR, HW), lambda r: (r, 0)),
                    pl.BlockSpec((GH, TR), lambda r: (0, 0)),
                    pl.BlockSpec((TR, GH), lambda r: (0, 0)),
                ],
                out_specs=pl.BlockSpec((TR, HW), lambda r: (r, 0)),
            ),
            compiler_params=pltpu.CompilerParams(
                dimension_semantics=("parallel",),
                vmem_limit_bytes=vmem_limit,
            ),
        )(x2, r1, r2)
        return out2.reshape(N, C, H, W)

    # ---- fallback: pool pass -> gate in plain JAX -> scale pass ----------
    THW = min(_round_up(HW, 128), 4096)
    TR1 = max(8, (budget // (THW * itemsize)) // 8 * 8)
    TR1 = min(TR1, _round_up(NC, 8))
    if TR1 >= NC and NC > 8:
        TR1 = max(8, _round_up((NC + 1) // 2, 8))   # keep >=2 parallel row steps
    grid_r = pl.cdiv(NC, TR1)
    grid_h = pl.cdiv(HW, THW)

    sums = pl.pallas_call(
        functools.partial(_pool_kernel, hw_total=HW, masked=(HW % THW != 0)),
        out_shape=jax.ShapeDtypeStruct((NC, 1), jnp.float32),
        grid_spec=pltpu.PrefetchScalarGridSpec(
            num_scalar_prefetch=0,
            grid=(grid_r, grid_h),
            in_specs=[pl.BlockSpec((TR1, THW), lambda r, h: (r, h))],
            out_specs=pl.BlockSpec((TR1, 1), lambda r, h: (r, 0)),
            scratch_shapes=[pltpu.VMEM((TR1, 1), jnp.float32)],
        ),
        compiler_params=pltpu.CompilerParams(
            dimension_semantics=("parallel", "arbitrary"),
            vmem_limit_bytes=vmem_limit,
        ),
    )(x2)

    # Tiny gate in plain JAX (keeps padded MXU/EUP work out of the streaming kernels).
    mean = sums.reshape(N, C) * (1.0 / HW)
    hidden = jnp.maximum(mean @ w1m.T, 0.0)
    gate = jax.nn.sigmoid(hidden @ w2m.T).astype(jnp.float32).reshape(NC, 1)

    out2 = pl.pallas_call(
        _scale_kernel,
        out_shape=jax.ShapeDtypeStruct((NC, HW), x.dtype),
        grid_spec=pltpu.PrefetchScalarGridSpec(
            num_scalar_prefetch=0,
            grid=(grid_r, grid_h),
            in_specs=[
                pl.BlockSpec((TR1, THW), lambda r, h: (r, h)),
                pl.BlockSpec((TR1, 1), lambda r, h: (r, 0)),
            ],
            out_specs=pl.BlockSpec((TR1, THW), lambda r, h: (r, h)),
        ),
        compiler_params=pltpu.CompilerParams(
            dimension_semantics=("parallel", "parallel"),
            vmem_limit_bytes=vmem_limit,
        ),
    )(x2, gate)
    return out2.reshape(N, C, H, W)


def _reference(x, w1, w2):
    # Pure-JAX reference for sanity checking.
    N, C, H, W = x.shape
    Cr = w1.shape[0]
    s = jnp.mean(x, axis=(2, 3))                       # (N, C)
    h = jnp.maximum(s @ w1.reshape(Cr, C).T, 0.0)      # (N, Cr)
    g = jax.nn.sigmoid(h @ w2.reshape(C, Cr).T)        # (N, C)
    return x * g[:, :, None, None]


if __name__ == "__main__":
    # Module config: channels=4, reduction=2  ->  Cr = 2
    N, C, H, W = 2, 4, 16, 16
    reduction = 2
    Cr = C // reduction

    key = jax.random.PRNGKey(0)
    kx, k1, k2 = jax.random.split(key, 3)

    x = jax.random.normal(kx, (N, C, H, W), dtype=jnp.float32)
    # Deterministic synthetic weights (same shapes as nn.Conv2d, bias=False).
    w1 = 0.1 * jax.random.normal(k1, (Cr, C, 1, 1), dtype=jnp.float32)
    w2 = 0.1 * jax.random.normal(k2, (C, Cr, 1, 1), dtype=jnp.float32)

    ref = _reference(x, w1, w2)

    # Fused single-pass path (default).
    out = jax.block_until_ready(se_conv(x, w1, w2))
    assert out.shape == (N, C, H, W)
    assert jnp.allclose(out, ref, atol=1e-5, rtol=1e-5)

    # Fused path with >=2 row tiles on the parallel grid axis.
    x4 = jax.random.normal(kx, (4, C, H, W), dtype=jnp.float32)
    out4 = jax.block_until_ready(se_conv(x4, w1, w2))
    assert jnp.allclose(out4, _reference(x4, w1, w2), atol=1e-5, rtol=1e-5)

    # Two-pass fallback (normally only taken when the full-HW slab exceeds the
    # per-generation VMEM block budget); exercised here explicitly.
    out_fb = jax.block_until_ready(se_conv(x, w1, w2, force_two_pass=True))
    assert jnp.allclose(out_fb, ref, atol=1e-5, rtol=1e-5)

    print("KERNEL_OK")
</pallas_src>

<mosaic_0001>
module attributes {stable_mosaic.version = 11 : i64} {
  func.func @_fused_kernel(%arg0: i32, %arg1: memref<8x256xf32, #tpu.memory_space<vmem>>, %arg2: memref<4x8xf32, #tpu.memory_space<vmem>>, %arg3: memref<8x4xf32, #tpu.memory_space<vmem>>, %arg4: memref<8x256xf32, #tpu.memory_space<vmem>>) attributes {dimension_semantics = [#tpu.dimension_semantics<parallel>], iteration_bounds = array<i64: 1>, scalar_prefetch = 0 : i64, scratch_operands = 0 : i64, tpu.core_type = #tpu.core_type<tc>, window_params = [{transform_indices = @transform_0, window_bounds = array<i64: 8, 256>}, {pipeline_mode = #tpu.pipeline_mode<synchronous>, transform_indices = @transform_1, window_bounds = array<i64: 4, 8>}, {pipeline_mode = #tpu.pipeline_mode<synchronous>, transform_indices = @transform_2, window_bounds = array<i64: 8, 4>}, {transform_indices = @transform_3, window_bounds = array<i64: 8, 256>}]} {
    %c0 = arith.constant 0 : index
    %c0_0 = arith.constant 0 : index
    %0 = vector.load %arg1[%c0, %c0_0] : memref<8x256xf32, #tpu.memory_space<vmem>>, vector<8x256xf32>
    %cst = arith.constant dense<0.000000e+00> : vector<8xf32>
    %1 = vector.multi_reduction <add>, %0, %cst [1] : vector<8x256xf32> to vector<8xf32>
    %2 = vector.shape_cast %1 : vector<8xf32> to vector<8x1xf32>
    %c0_1 = arith.constant 0 : index
    %c0_2 = arith.constant 0 : index
    %3 = vector.load %arg2[%c0_1, %c0_2] : memref<4x8xf32, #tpu.memory_space<vmem>>, vector<4x8xf32>
    %cst_3 = arith.constant dense<0.000000e+00> : vector<4x1xf32>
    %4 = tpu.matmul %3, %2, %cst_3 {dimension_numbers = #tpu.dot_dimension_numbers<[1], [0], [0], [1], [0, 0, 1, 1], [], []>} : vector<4x8xf32>, vector<8x1xf32>, vector<4x1xf32> -> vector<4x1xf32>
    %cst_4 = arith.constant 0.000000e+00 : f32
    %5 = vector.broadcast %cst_4 : f32 to vector<4x1xf32>
    %6 = arith.maximumf %4, %5 : vector<4x1xf32>
    %c0_5 = arith.constant 0 : index
    %c0_6 = arith.constant 0 : index
    %7 = vector.load %arg3[%c0_5, %c0_6] : memref<8x4xf32, #tpu.memory_space<vmem>>, vector<8x4xf32>
    %cst_7 = arith.constant dense<0.000000e+00> : vector<8x1xf32>
    %8 = tpu.matmul %7, %6, %cst_7 {dimension_numbers = #tpu.dot_dimension_numbers<[1], [0], [0], [1], [0, 0, 1, 1], [], []>} : vector<8x4xf32>, vector<4x1xf32>, vector<8x1xf32> -> vector<8x1xf32>
    %9 = arith.negf %8 : vector<8x1xf32>
    %10 = math.exp %9 : vector<8x1xf32>
    %cst_8 = arith.constant 1.000000e+00 : f32
    %11 = vector.broadcast %cst_8 : f32 to vector<8x1xf32>
    %12 = arith.addf %11, %10 : vector<8x1xf32>
    %13 = arith.divf %11, %12 : vector<8x1xf32>
    %14 = vector.broadcast %13 : vector<8x1xf32> to vector<8x256xf32>
    %15 = arith.mulf %0, %14 : vector<8x256xf32>
    %c0_9 = arith.constant 0 : index
    %c0_10 = arith.constant 0 : index
    %16 = vector.load %arg4[%c0_9, %c0_10] : memref<8x256xf32, #tpu.memory_space<vmem>>, vector<8x256xf32>
    tpu.vector_store %arg4[%c0_9, %c0_10], %15 {strides = array<i32>} : memref<8x256xf32, #tpu.memory_space<vmem>>, vector<8x256xf32>,
    return
  }
  func.func @transform_0(%arg0: i32) -> (i32, i32) {
    %c0_i32 = arith.constant 0 : i32
    %c0_i32_0 = arith.constant 0 : i32
    return %arg0, %c0_i32 : i32, i32
  }
  func.func @transform_1(%arg0: i32) -> (i32, i32) {
    %c0_i32 = arith.constant 0 : i32
    %c0_i32_0 = arith.constant 0 : i32
    %c0_i32_1 = arith.constant 0 : i32
    return %c0_i32, %c0_i32_0 : i32, i32
  }
  func.func @transform_2(%arg0: i32) -> (i32, i32) {
    %c0_i32 = arith.constant 0 : i32
    %c0_i32_0 = arith.constant 0 : i32
    %c0_i32_1 = arith.constant 0 : i32
    return %c0_i32, %c0_i32_0 : i32, i32
  }
  func.func @transform_3(%arg0: i32) -> (i32, i32) {
    %c0_i32 = arith.constant 0 : i32
    %c0_i32_0 = arith.constant 0 : i32
    return %arg0, %c0_i32 : i32, i32
  }
}

</mosaic_0001>

<llo_original>
// kernel: tpu_custom_call.1
$region0: #{tpu_custom_call.1}
  #allocation0 [shape = 'u32[]', space=smem, size = 0x4, offset = 0x4, fixed_abs, tag = 'smem constant byte address 0x4 - core index']
  #allocation1 [shape = 'u32[144,128]{1,0:T(1,128)}', space=vmem, size = 0x12000, scoped, tag = 'internal scratch']
  %s0 = inlined_call_operand.hbm [shape: f32[8,256], index: 0, kind: input, shape index: {}]
  %s1 = inlined_call_operand.vmem [shape: f32[4,8], index: 1, kind: input, shape index: {}]
  %s2 = inlined_call_operand.vmem [shape: f32[8,4], index: 2, kind: input, shape index: {}]
  %s3 = inlined_call_operand.hbm [shape: f32[8,256], index: 3, kind: output, shape index: {}]
  %s4 = sld [smem:[#allocation0]]
  $region26: #{tpu_custom_call.1} parent=0
    _
  %s6 = ssub.s32 1, %s4
  %s7 = scalar_select 0, %s6, %s4
  $region1: #{tpu_custom_call.1} parent=0
    #allocation2 [shape = 'u8[8192]{0}', space=vmem, size = 0x2000, scoped, tag = 'input window, operand 0, single buffered']
    #allocation3 [shape = 's32[1]{0}', space=sflag, size = 0x4, scoped, tag = 'scoped memory for tpu_custom_call.1']
    #allocation4 [shape = 's32[1]{0}', space=sflag, size = 0x4, scoped, tag = 'scoped memory for tpu_custom_call.1']
    #allocation5 [shape = 'u8[8192]{0}', space=vmem, size = 0x2000, scoped, tag = 'output window, operand 0, single buffered']
    %8 = vsyncpa [#allocation3], 0
    %9 = vsyncpa [#allocation4], 0
    // Predicated region
    $region2: #{tpu_custom_call.1} parent=1 // pred_check
      _
    $region3: #{tpu_custom_call.1} parent=1 // pred_check_branch
      %11 = sbr.rel (0) target = $region5
    $region4: #{tpu_custom_call.1} parent=1 // pred_region
      %s13 = ssub.s32 256, 256
      %14 = vsyncadd [#allocation3], %s13
      %s16 = sshll.u32 [#allocation2], 4
      %s17 = int_to_ptr.vmem [resolvable:$true] %s16
      %19 = dma.hbm_to_vmem [thread:$0]  %s0, 256, %s17, [#allocation3]
    $region5: #{tpu_custom_call.1} parent=1 // pred_fallthru
      _
    // Predicated region
    $region6: #{tpu_custom_call.1} parent=1 // pred_check
      _
    $region7: #{tpu_custom_call.1} parent=1 // pred_check_branch
      %21 = sbr.rel (0) target = $region9
    $region8: #{tpu_custom_call.1} parent=1 // pred_region
      _
    $region9: #{tpu_custom_call.1} parent=1 // pred_fallthru
      _
    // Predicated region
    $region10: #{tpu_custom_call.1} parent=1 // pred_check
      _
    $region11: #{tpu_custom_call.1} parent=1 // pred_check_branch
      %23 = sbr.rel (0) target = $region13
    $region12: #{tpu_custom_call.1} parent=1 // pred_region
      _
    $region13: #{tpu_custom_call.1} parent=1 // pred_fallthru
      _
    // Predicated region
    $region14: #{tpu_custom_call.1} parent=1 // pred_check
      _
    $region15: #{tpu_custom_call.1} parent=1 // pred_check_branch
      %25 = sbr.rel (0) target = $region17
    $region16: #{tpu_custom_call.1} parent=1 // pred_region
      %26 = dma.done [#allocation3], 256
    $region17: #{tpu_custom_call.1} parent=1 // pred_fallthru
      _
    %v27 = vld [vmem:[#allocation2] sm:$0xff]
    %v28 = vld [vmem:[#allocation2 + $0x8] sm:$0xff]
    %v29 = vadd.f32 %v27, %v28
    %30 = vadd.xlane.f32.xlu0 %v29
    %v31 = vpop.xlane.xlu0 %30
    %v32 = vld [vmem:[%s1] sm:$0xf]
    %vm33 = vcmask 64512
    %v35 = vsel %vm33, %v32, 0
    %37 = vmatprep.subr.mxu0 0.0
    %38 = vmatpush1.msra.mxu0 0.0
    %39 = vmatprep.subr.mxu0 0.0
    %40 = vmatpush1.msra.mxu0 0.0
    %41 = vmatprep.subr.mxu0 0.0
    %42 = vmatpush1.msra.mxu0 0.0
    %43 = vmatprep.subr.mxu0 0.0
    %44 = vmatpush1.msra.mxu0 0.0
    %45 = vmatprep.subr.mxu0 0.0
    %46 = vmatpush1.msra.mxu0 0.0
    %47 = vmatprep.subr.mxu0 0.0
    %48 = vmatpush1.msra.mxu0 0.0
    %49 = vmatprep.subr.mxu0 0.0
    %50 = vmatpush1.msra.mxu0 0.0
    %51 = vmatprep.subr.mxu0 0.0
    %52 = vmatpush1.msra.mxu0 0.0
    %53 = vmatprep.subr.mxu0 0.0
    %54 = vmatpush1.msra.mxu0 0.0
    %55 = vmatprep.subr.mxu0 0.0
    %56 = vmatpush1.msra.mxu0 0.0
    %57 = vmatprep.subr.mxu0 0.0
    %58 = vmatpush1.msra.mxu0 0.0
    %59 = vmatprep.subr.mxu0 0.0
    %60 = vmatpush1.msra.mxu0 0.0
    %61 = vmatprep.subr.mxu0 0.0
    %62 = vmatpush1.msra.mxu0 0.0
    %63 = vmatprep.subr.mxu0 0.0
    %64 = vmatpush1.msra.mxu0 0.0
    %65 = vmatprep.subr.mxu0 0.0
    %66 = vmatpush1.msra.mxu0 0.0
    %67 = vmatprep.subr.mxu0 0.0
    %68 = vmatpush1.msra.mxu0 %v31
    %69 = vmatprep.subr.mxu0 0.0
    %70 = vmatpush2.msra.mxu0 0.0
    %71 = vmatprep.subr.mxu0 0.0
    %72 = vmatpush2.msra.mxu0 0.0
    %73 = vmatprep.subr.mxu0 0.0
    %74 = vmatpush2.msra.mxu0 0.0
    %75 = vmatprep.subr.mxu0 0.0
    %76 = vmatpush2.msra.mxu0 0.0
    %77 = vmatprep.subr.mxu0 0.0
    %78 = vmatpush2.msra.mxu0 0.0
    %79 = vmatprep.subr.mxu0 0.0
    %80 = vmatpush2.msra.mxu0 0.0
    %81 = vmatprep.subr.mxu0 0.0
    %82 = vmatpush2.msra.mxu0 0.0
    %83 = vmatprep.subr.mxu0 0.0
    %84 = vmatpush2.msra.mxu0 0.0
    %85 = vmatprep.subr.mxu0 0.0
    %86 = vmatpush2.msra.mxu0 0.0
    %87 = vmatprep.subr.mxu0 0.0
    %88 = vmatpush2.msra.mxu0 0.0
    %89 = vmatprep.subr.mxu0 0.0
    %90 = vmatpush2.msra.mxu0 0.0
    %91 = vmatprep.subr.mxu0 0.0
    %92 = vmatpush2.msra.mxu0 0.0
    %93 = vmatprep.subr.mxu0 0.0
    %94 = vmatpush2.msra.mxu0 0.0
    %95 = vmatprep.subr.mxu0 0.0
    %96 = vmatpush2.msra.mxu0 0.0
    %97 = vmatprep.subr.mxu0 0.0
    %98 = vmatpush2.msra.mxu0 0.0
    %99 = vmatprep.subr.mxu0 0.0
    %100 = vmatpush2.msra.mxu0 0.0
    %101 = vmatprep.mubr.f32.mxu0 0.0
    %102 = vmatmul.mubr.f32.gmra.mxu0 %v35
    %v103 = vpop.f32.mrf.mxu0
    %v104 = vadd.f32 0.0, %v103
    %v105 = vpop.f32.mrf.mxu0
    %106 = vdwg.mxu0
    %v107 = vmax.f32 %v104, 0.0
    %v108 = vld [vmem:[%s2] sm:$0xff]
    %vm109 = vcmask 31744
    %v111 = vsel %vm109, %v108, 0
    %vm113 = vcmask 1043456
    %v115 = vsel %vm113, %v107, 0
    %117 = vmatprep.subr.mxu0 0.0
    %118 = vmatpush1.msra.mxu0 0.0
    %119 = vmatprep.subr.mxu0 0.0
    %120 = vmatpush1.msra.mxu0 0.0
    %121 = vmatprep.subr.mxu0 0.0
    %122 = vmatpush1.msra.mxu0 0.0
    %123 = vmatprep.subr.mxu0 0.0
    %124 = vmatpush1.msra.mxu0 0.0
    %125 = vmatprep.subr.mxu0 0.0
    %126 = vmatpush1.msra.mxu0 0.0
    %127 = vmatprep.subr.mxu0 0.0
    %128 = vmatpush1.msra.mxu0 0.0
    %129 = vmatprep.subr.mxu0 0.0
    %130 = vmatpush1.msra.mxu0 0.0
    %131 = vmatprep.subr.mxu0 0.0
    %132 = vmatpush1.msra.mxu0 0.0
    %133 = vmatprep.subr.mxu0 0.0
    %134 = vmatpush1.msra.mxu0 0.0
    %135 = vmatprep.subr.mxu0 0.0
    %136 = vmatpush1.msra.mxu0 0.0
    %137 = vmatprep.subr.mxu0 0.0
    %138 = vmatpush1.msra.mxu0 0.0
    %139 = vmatprep.subr.mxu0 0.0
    %140 = vmatpush1.msra.mxu0 0.0
    %141 = vmatprep.subr.mxu0 0.0
    %142 = vmatpush1.msra.mxu0 0.0
    %143 = vmatprep.subr.mxu0 0.0
    %144 = vmatpush1.msra.mxu0 0.0
    %145 = vmatprep.subr.mxu0 0.0
    %146 = vmatpush1.msra.mxu0 0.0
    %147 = vmatprep.subr.mxu0 0.0
    %148 = vmatpush1.msra.mxu0 %v115
    %149 = vmatprep.subr.mxu0 0.0
    %150 = vmatpush2.msra.mxu0 0.0
    %151 = vmatprep.subr.mxu0 0.0
    %152 = vmatpush2.msra.mxu0 0.0
    %153 = vmatprep.subr.mxu0 0.0
    %154 = vmatpush2.msra.mxu0 0.0
    %155 = vmatprep.subr.mxu0 0.0
    %156 = vmatpush2.msra.mxu0 0.0
    %157 = vmatprep.subr.mxu0 0.0
    %158 = vmatpush2.msra.mxu0 0.0
    %159 = vmatprep.subr.mxu0 0.0
    %160 = vmatpush2.msra.mxu0 0.0
    %161 = vmatprep.subr.mxu0 0.0
    %162 = vmatpush2.msra.mxu0 0.0
    %163 = vmatprep.subr.mxu0 0.0
    %164 = vmatpush2.msra.mxu0 0.0
    %165 = vmatprep.subr.mxu0 0.0
    %166 = vmatpush2.msra.mxu0 0.0
    %167 = vmatprep.subr.mxu0 0.0
    %168 = vmatpush2.msra.mxu0 0.0
    %169 = vmatprep.subr.mxu0 0.0
    %170 = vmatpush2.msra.mxu0 0.0
    %171 = vmatprep.subr.mxu0 0.0
    %172 = vmatpush2.msra.mxu0 0.0
    %173 = vmatprep.subr.mxu0 0.0
    %174 = vmatpush2.msra.mxu0 0.0
    %175 = vmatprep.subr.mxu0 0.0
    %176 = vmatpush2.msra.mxu0 0.0
    %177 = vmatprep.subr.mxu0 0.0
    %178 = vmatpush2.msra.mxu0 0.0
    %179 = vmatprep.subr.mxu0 0.0
    %180 = vmatpush2.msra.mxu0 0.0
    %181 = vmatprep.mubr.f32.mxu0 0.0
    %182 = vmatmul.mubr.f32.gmra.mxu0 %v111
    %v183 = vpop.f32.mrf.mxu0
    %v184 = vadd.f32 0.0, %v183
    %v185 = vpop.f32.mrf.mxu0
    %186 = vdwg.mxu0
    %v187 = vxor.u32 %v184, 2147483648
    %v188 = vmul.f32 %v187, 1.442695
    %v189 = vpow.pop %v188
    %v190 = vadd.f32 %v189, 1.0
    %v191 = vrcp.pop %v190
    %v192 = vmul.f32 1.0, %v191
    %194 = vset.pattern.permute.xlu0 0
    %195 = vperm.xlu0 %194, %v192
    %v196 = vpop.permute.xlu0 %195
    %v198 = vmul.f32 %v27, %v196
    %v199 = vmul.f32 %v28, %v196
    %200 = vst [vmem:[#allocation5] sm:$0xff] %v198
    %201 = vst [vmem:[#allocation5 + $0x8] sm:$0xff] %v199
    // Predicated region
    $region18: #{tpu_custom_call.1} parent=1 // pred_check
      _
    $region19: #{tpu_custom_call.1} parent=1 // pred_check_branch
      %203 = sbr.rel (0) target = $region21
    $region20: #{tpu_custom_call.1} parent=1 // pred_region
      %s205 = ssub.s32 256, 256
      %206 = vsyncadd [#allocation4], %s205
      %s208 = sshll.u32 [#allocation5], 4
      %s209 = int_to_ptr.vmem [resolvable:$true] %s208
      %211 = dma.vmem_to_hbm [thread:$0]  %s209, 256, %s3, [#allocation4]
    $region21: #{tpu_custom_call.1} parent=1 // pred_fallthru
      _
    // Predicated region
    $region22: #{tpu_custom_call.1} parent=1 // pred_check
      _
    $region23: #{tpu_custom_call.1} parent=1 // pred_check_branch
      %213 = sbr.rel (0) target = $region25
    $region24: #{tpu_custom_call.1} parent=1 // pred_region
      %214 = dma.done [#allocation4], 256
    $region25: #{tpu_custom_call.1} parent=1 // pred_fallthru
      _
    %215 = vsyncpa [#allocation3], 1
    %216 = vsyncpa [#allocation4], 1

</llo_original>
